<compile_context>
chip_gen: v5e
topology: v5e:2x2
jax: 0.10.0
libtpu: 0.0.40
codegen_flags: <defaults>
</compile_context>

<pallas_src>
import functools

import jax
import jax.numpy as jnp
from jax.experimental import pallas as pl
from jax.experimental.pallas import tpu as pltpu

_LANE = 128
_VMEM_LIMIT_BYTES = 56 * 1024 * 1024   # scoped VMEM limit; safe vs v7x 64 MiB physical
_TILE_BUDGET_BYTES = 24 * 1024 * 1024  # budget for 2 buffers x (x tile + out tile)
_MAX_ROW_TILE = 1024


def _rmsnorm_kernel(x_ref, w_ref, o_ref, *, eps, inv_h):
    # x_ref: (TR, Hp), w_ref: (1, Hp), o_ref: (TR, Hp)
    x = x_ref[...].astype(jnp.float32)
    w = w_ref[...].astype(jnp.float32)                      # broadcasts over rows
    ms = jnp.sum(x * x, axis=-1, keepdims=True) * inv_h     # mean over the TRUE H
    inv = jax.lax.rsqrt(ms + eps)                           # EUP slot
    o_ref[...] = (x * inv * w).astype(o_ref.dtype)


def _round_up(a, b):
    return ((a + b - 1) // b) * b


def rmsnorm(x, weight, eps=1e-5):
    """RMSNorm over the last axis of x, matching the PyTorch module semantics."""
    orig_shape = x.shape
    H = orig_shape[-1]
    R = 1
    for d in orig_shape[:-1]:
        R *= d
    x2d = x.reshape(R, H)

    # Lane-dense layout: pad hidden to a multiple of 128 lanes. Zero padding does
    # not perturb the reduction because we normalize by the true H, and padded
    # output lanes are sliced off below.
    Hp = _round_up(H, _LANE)
    if Hp != H:
        x2d = jnp.pad(x2d, ((0, 0), (0, Hp - H)))
        w2d = jnp.pad(weight.reshape(1, H), ((0, 0), (0, Hp - H)))
    else:
        w2d = weight.reshape(1, H)

    # Sublane granularity by dtype packing: f32 -> 8, bf16 -> 16, int8/fp8 -> 32.
    itemsize = jnp.dtype(x.dtype).itemsize
    sublane = max(8, 32 // max(itemsize, 1))

    # Row tile: as many rows as fit the VMEM budget (2 buffers x (in + out)),
    # capped at _MAX_ROW_TILE and rounded to the sublane granularity.
    row_bytes = Hp * itemsize
    max_rows_by_vmem = max(sublane, _TILE_BUDGET_BYTES // (4 * row_bytes))
    tr = min(_MAX_ROW_TILE, max_rows_by_vmem)
    tr = max(sublane, (tr // sublane) * sublane)
    tr = min(tr, _round_up(R, sublane))   # don't over-pad tiny inputs

    # Pad rows so the grid divides evenly (padded tail rows are sliced off).
    Rp = _round_up(R, tr)
    if Rp != R:
        x2d = jnp.pad(x2d, ((0, Rp - R), (0, 0)))

    grid = (Rp // tr,)

    out = pl.pallas_call(
        functools.partial(_rmsnorm_kernel, eps=eps, inv_h=1.0 / H),
        out_shape=jax.ShapeDtypeStruct((Rp, Hp), x.dtype),
        grid_spec=pltpu.PrefetchScalarGridSpec(
            num_scalar_prefetch=0,
            grid=grid,
            in_specs=[
                pl.BlockSpec((tr, Hp), lambda i: (i, 0)),   # x row tile (streamed)
                pl.BlockSpec((1, Hp), lambda i: (0, 0)),    # weight (constant index -> deduped)
            ],
            out_specs=pl.BlockSpec((tr, Hp), lambda i: (i, 0)),
        ),
        compiler_params=pltpu.CompilerParams(
            dimension_semantics=("parallel",),              # shards rows across TCs on v7x
            vmem_limit_bytes=_VMEM_LIMIT_BYTES,
        ),
    )(x2d, w2d)

    out = out[:R, :H]
    return out.reshape(orig_shape)


def rmsnorm_ref(x, weight, eps=1e-5):
    ms = jnp.mean(jnp.square(x), axis=-1, keepdims=True)
    return x * jax.lax.rsqrt(ms + eps) * weight


if __name__ == "__main__":
    key = jax.random.PRNGKey(0)
    batch, seq, hidden = 2, 8, 32

    x = jax.random.normal(key, (batch, seq, hidden), dtype=jnp.float32)
    # Deterministic parameter init: PyTorch initializes weight to ones.
    weight = jnp.ones((hidden,), dtype=jnp.float32)

    out = rmsnorm(x, weight, eps=1e-5)
    out = jax.block_until_ready(out)

    ref = rmsnorm_ref(x, weight, eps=1e-5)
    assert out.shape == x.shape
    assert jnp.allclose(out, ref, atol=1e-5, rtol=1e-5), "mismatch vs reference"

    # Quick ragged / larger-shape sanity check (exercises row padding path).
    x2 = jax.random.normal(jax.random.PRNGKey(1), (3, 5, hidden), dtype=jnp.float32)
    out2 = jax.block_until_ready(rmsnorm(x2, weight, eps=1e-5))
    ref2 = rmsnorm_ref(x2, weight, eps=1e-5)
    assert jnp.allclose(out2, ref2, atol=1e-5, rtol=1e-5), "mismatch vs reference (ragged)"

    print("KERNEL_OK")
</pallas_src>

<mosaic_0001>
module attributes {stable_mosaic.version = 11 : i64} {
  func.func @_rmsnorm_kernel(%arg0: i32, %arg1: memref<16x128xf32, #tpu.memory_space<vmem>>, %arg2: memref<1x128xf32, #tpu.memory_space<vmem>>, %arg3: memref<16x128xf32, #tpu.memory_space<vmem>>) attributes {dimension_semantics = [#tpu.dimension_semantics<parallel>], iteration_bounds = array<i64: 1>, scalar_prefetch = 0 : i64, scratch_operands = 0 : i64, tpu.core_type = #tpu.core_type<tc>, window_params = [{transform_indices = @transform_0, window_bounds = array<i64: 16, 128>}, {pipeline_mode = #tpu.pipeline_mode<synchronous>, transform_indices = @transform_1, window_bounds = array<i64: 1, 128>}, {transform_indices = @transform_2, window_bounds = array<i64: 16, 128>}]} {
    %c0 = arith.constant 0 : index
    %c0_0 = arith.constant 0 : index
    %0 = vector.load %arg1[%c0, %c0_0] : memref<16x128xf32, #tpu.memory_space<vmem>>, vector<16x128xf32>
    %c0_1 = arith.constant 0 : index
    %c0_2 = arith.constant 0 : index
    %1 = vector.load %arg2[%c0_1, %c0_2] : memref<1x128xf32, #tpu.memory_space<vmem>>, vector<1x128xf32>
    %2 = arith.mulf %0, %0 : vector<16x128xf32>
    %cst = arith.constant dense<0.000000e+00> : vector<16xf32>
    %3 = vector.multi_reduction <add>, %2, %cst [1] : vector<16x128xf32> to vector<16xf32>
    %4 = vector.shape_cast %3 : vector<16xf32> to vector<16x1xf32>
    %cst_3 = arith.constant 3.125000e-02 : f32
    %5 = vector.broadcast %cst_3 : f32 to vector<16x1xf32>
    %6 = arith.mulf %4, %5 : vector<16x1xf32>
    %cst_4 = arith.constant 9.99999974E-6 : f32
    %7 = vector.broadcast %cst_4 : f32 to vector<16x1xf32>
    %8 = arith.addf %6, %7 : vector<16x1xf32>
    %9 = math.rsqrt %8 : vector<16x1xf32>
    %10 = vector.broadcast %9 : vector<16x1xf32> to vector<16x128xf32>
    %11 = arith.mulf %0, %10 : vector<16x128xf32>
    %12 = vector.broadcast %1 : vector<1x128xf32> to vector<16x128xf32>
    %13 = arith.mulf %11, %12 : vector<16x128xf32>
    %c0_5 = arith.constant 0 : index
    %c0_6 = arith.constant 0 : index
    %14 = vector.load %arg3[%c0_5, %c0_6] : memref<16x128xf32, #tpu.memory_space<vmem>>, vector<16x128xf32>
    tpu.vector_store %arg3[%c0_5, %c0_6], %13 {strides = array<i32>} : memref<16x128xf32, #tpu.memory_space<vmem>>, vector<16x128xf32>,
    return
  }
  func.func @transform_0(%arg0: i32) -> (i32, i32) {
    %c0_i32 = arith.constant 0 : i32
    %c0_i32_0 = arith.constant 0 : i32
    return %arg0, %c0_i32 : i32, i32
  }
  func.func @transform_1(%arg0: i32) -> (i32, i32) {
    %c0_i32 = arith.constant 0 : i32
    %c0_i32_0 = arith.constant 0 : i32
    %c0_i32_1 = arith.constant 0 : i32
    return %c0_i32, %c0_i32_0 : i32, i32
  }
  func.func @transform_2(%arg0: i32) -> (i32, i32) {
    %c0_i32 = arith.constant 0 : i32
    %c0_i32_0 = arith.constant 0 : i32
    return %arg0, %c0_i32 : i32, i32
  }
}

</mosaic_0001>

<llo_original>
// kernel: tpu_custom_call.1
$region0: #{tpu_custom_call.1}
  #allocation0 [shape = 'u32[]', space=smem, size = 0x4, offset = 0x4, fixed_abs, tag = 'smem constant byte address 0x4 - core index']
  #allocation1 [shape = 'u32[72,128]{1,0:T(1,128)}', space=vmem, size = 0x9000, scoped, tag = 'internal scratch']
  %s0 = inlined_call_operand.hbm [shape: f32[16,128], index: 0, kind: input, shape index: {}]
  %s1 = inlined_call_operand.hbm [shape: f32[1,128], index: 1, kind: input, shape index: {}]
  %s2 = inlined_call_operand.hbm [shape: f32[16,128], index: 2, kind: output, shape index: {}]
  %s3 = sld [smem:[#allocation0]]
  $region26: #{tpu_custom_call.1} parent=0
    _
  %s5 = ssub.s32 1, %s3
  %s6 = scalar_select 0, %s5, %s3
  $region1: #{tpu_custom_call.1} parent=0
    #allocation2 [shape = 'u8[8192]{0}', space=vmem, size = 0x2000, scoped, tag = 'input window, operand 0, single buffered']
    #allocation3 [shape = 's32[1]{0}', space=sflag, size = 0x4, scoped, tag = 'scoped memory for tpu_custom_call.1']
    #allocation4 [shape = 's32[1]{0}', space=sflag, size = 0x4, scoped, tag = 'scoped memory for tpu_custom_call.1']
    #allocation5 [shape = 'u8[512]{0}', space=vmem, size = 0x400, scoped, tag = 'input window, operand 1, single buffered']
    #allocation6 [shape = 's32[1]{0}', space=sflag, size = 0x4, scoped, tag = 'scoped memory for tpu_custom_call.1']
    #allocation7 [shape = 'u8[8192]{0}', space=vmem, size = 0x2000, scoped, tag = 'output window, operand 0, single buffered']
    %7 = vsyncpa [#allocation3], 0
    %8 = vsyncpa [#allocation6], 0
    %9 = vsyncpa [#allocation4], 0
    // Predicated region
    $region2: #{tpu_custom_call.1} parent=1 // pred_check
      _
    $region3: #{tpu_custom_call.1} parent=1 // pred_check_branch
      %11 = sbr.rel (0) target = $region5
    $region4: #{tpu_custom_call.1} parent=1 // pred_region
      %13 = vsyncadd [#allocation3], 0
      %s14 = sshll.u32 %s0, 4
      %s15 = int_to_ptr.hbm [resolvable:$true] %s14
      %s16 = sshll.u32 [#allocation2], 4
      %s17 = int_to_ptr.vmem [resolvable:$true] %s16
      %22 = dma.hbm_to_vmem [thread:$0]  %s15, 256, %s17, [#allocation3], 128, 128, 8
    $region5: #{tpu_custom_call.1} parent=1 // pred_fallthru
      _
    // Predicated region
    $region6: #{tpu_custom_call.1} parent=1 // pred_check
      _
    $region7: #{tpu_custom_call.1} parent=1 // pred_check_branch
      %24 = sbr.rel (0) target = $region9
    $region8: #{tpu_custom_call.1} parent=1 // pred_region
      %26 = vsyncadd [#allocation6], 0
      %s28 = sshll.u32 %s1, 4
      %s29 = int_to_ptr.hbm [resolvable:$true] %s28
      %s30 = sshll.u32 [#allocation5], 4
      %s31 = int_to_ptr.vmem [resolvable:$true] %s30
      %33 = dma.hbm_to_vmem [thread:$0]  %s29, 16, %s31, [#allocation6]
    $region9: #{tpu_custom_call.1} parent=1 // pred_fallthru
      _
    // Predicated region
    $region10: #{tpu_custom_call.1} parent=1 // pred_check
      _
    $region11: #{tpu_custom_call.1} parent=1 // pred_check_branch
      %35 = sbr.rel (0) target = $region13
    $region12: #{tpu_custom_call.1} parent=1 // pred_region
      %37 = dma.done [#allocation3], 256
    $region13: #{tpu_custom_call.1} parent=1 // pred_fallthru
      _
    // Predicated region
    $region14: #{tpu_custom_call.1} parent=1 // pred_check
      _
    $region15: #{tpu_custom_call.1} parent=1 // pred_check_branch
      %39 = sbr.rel (0) target = $region17
    $region16: #{tpu_custom_call.1} parent=1 // pred_region
      %41 = dma.done [#allocation6], 16
    $region17: #{tpu_custom_call.1} parent=1 // pred_fallthru
      _
    %v42 = vld [vmem:[#allocation2] sm:$0xff]
    %v43 = vld [vmem:[#allocation2 + $0x8] sm:$0xff]
    %v44 = vld [vmem:[#allocation5] sm:$0x1]
    %v45 = vmul.f32 %v42, %v42
    %v46 = vmul.f32 %v43, %v43
    %47 = vadd.xlane.f32.xlu0 %v45
    %v48 = vpop.xlane.xlu0 %47
    %49 = vadd.xlane.f32.xlu0 %v46
    %v50 = vpop.xlane.xlu0 %49
    %v51 = vmul.f32 %v48, 0.03125
    %v52 = vmul.f32 %v50, 0.03125
    %v53 = vadd.f32 %v51, 1e-05
    %v54 = vadd.f32 %v52, 1e-05
    %v55 = vrsqrt.pop %v53
    %v56 = vmul.f32 %v55, %v53
    %v57 = vmul.f32 %v56, %v55
    %v58 = vmul.f32 0.5, %v57
    %v59 = vsub.f32 1.5, %v58
    %v60 = vmul.f32 %v55, %v59
    %vm61 = vweird.f32 %v53
    %vm62 = vweird.f32 %v55
    %vm63 = vmor %vm61, %vm62
    %v64 = vsel %vm63, %v55, %v60
    %v65 = vrsqrt.pop %v54
    %v66 = vmul.f32 %v65, %v54
    %v67 = vmul.f32 %v66, %v65
    %v68 = vmul.f32 0.5, %v67
    %v69 = vsub.f32 1.5, %v68
    %v70 = vmul.f32 %v65, %v69
    %vm71 = vweird.f32 %v54
    %vm72 = vweird.f32 %v65
    %vm73 = vmor %vm71, %vm72
    %v74 = vsel %vm73, %v65, %v70
    %v75 = vmul.f32 %v42, %v64
    %v76 = vmul.f32 %v43, %v74
    %v78 = vperm.slane %v44, 0
    %v80 = vmul.f32 %v75, %v78
    %v81 = vmul.f32 %v76, %v78
    %82 = vst [vmem:[#allocation7] sm:$0xff] %v80
    %83 = vst [vmem:[#allocation7 + $0x8] sm:$0xff] %v81
    // Predicated region
    $region18: #{tpu_custom_call.1} parent=1 // pred_check
      _
    $region19: #{tpu_custom_call.1} parent=1 // pred_check_branch
      %85 = sbr.rel (0) target = $region21
    $region20: #{tpu_custom_call.1} parent=1 // pred_region
      %87 = vsyncadd [#allocation4], 0
      %s88 = sshll.u32 [#allocation7], 4
      %s89 = int_to_ptr.vmem [resolvable:$true] %s88
      %s90 = sshll.u32 %s2, 4
      %s91 = int_to_ptr.hbm [resolvable:$true] %s90
      %96 = dma.vmem_to_hbm [thread:$0]  %s89, 256, %s91, [#allocation4], 128, 128, 8
    $region21: #{tpu_custom_call.1} parent=1 // pred_fallthru
      _
    // Predicated region
    $region22: #{tpu_custom_call.1} parent=1 // pred_check
      _
    $region23: #{tpu_custom_call.1} parent=1 // pred_check_branch
      %98 = sbr.rel (0) target = $region25
    $region24: #{tpu_custom_call.1} parent=1 // pred_region
      %100 = dma.done [#allocation4], 256
    $region25: #{tpu_custom_call.1} parent=1 // pred_fallthru
      _
    %101 = vsyncpa [#allocation3], 1
    %102 = vsyncpa [#allocation6], 1
    %103 = vsyncpa [#allocation4], 1

</llo_original>
